<compile_context>
chip_gen: v6e
topology: v6e:2x2x1
jax: 0.10.0
libtpu: 0.0.40
codegen_flags: <defaults>
</compile_context>

<pallas_src>
import jax
import jax.numpy as jnp
from jax.experimental import pallas as pl
from jax.experimental.pallas import tpu as pltpu

FEATURES = 2
H1, H2, OUT = 20, 10, 4
MAX_TB = 1024  # batch-tile cap (multiple of 128 lanes)


def _fma_layer(w, b, h):
    """w @ h + b via unrolled VPU broadcast FMAs.

    w: (n_out, k) weights, b: (n_out, 1) bias, h: (k, TB) activations with
    batch on lanes.  k is 2/20/10, so the MXU would be <2% utilized -- a few
    exact-f32 VPU FMAs per layer are cheaper and hide under the x/out DMA.
    """
    acc = b                                   # (n_out, 1) -> broadcasts over lanes
    for j in range(w.shape[1]):
        acc = acc + w[:, j:j + 1] * h[j:j + 1, :]
    return acc


def mlp_kernel(x_ref, w1_ref, b1_ref, w2_ref, b2_ref, w3_ref, b3_ref, o_ref):
    x = x_ref[...]                                                    # (FEATURES, TB)
    h1 = jnp.maximum(_fma_layer(w1_ref[...], b1_ref[...], x), 0.0)    # (H1, TB)
    h2 = jnp.maximum(_fma_layer(w2_ref[...], b2_ref[...], h1), 0.0)   # (H2, TB)
    o_ref[...] = _fma_layer(w3_ref[...], b3_ref[...], h2)             # (OUT, TB) lane-dense store


def blob_classification(x, params):
    """x: (B, FEATURES) row-major (PyTorch layout). Returns (B, OUT) float32."""
    w1, b1, w2, b2, w3, b3 = params
    B = x.shape[0]
    TB = min(MAX_TB, pl.cdiv(B, 128) * 128)   # full-lane tile, capped
    B_pad = pl.cdiv(B, TB) * TB

    xt = x.astype(jnp.float32).T              # (FEATURES, B): batch -> lanes
    if B_pad != B:
        xt = jnp.pad(xt, ((0, 0), (0, B_pad - B)))

    out_t = pl.pallas_call(
        mlp_kernel,
        out_shape=jax.ShapeDtypeStruct((OUT, B_pad), jnp.float32),
        grid=(B_pad // TB,),
        in_specs=[
            pl.BlockSpec((FEATURES, TB), lambda i: (0, i)),   # x^T, batch-tiled
            pl.BlockSpec((H1, FEATURES), lambda i: (0, 0)),   # w1 (VMEM-resident)
            pl.BlockSpec((H1, 1), lambda i: (0, 0)),          # b1
            pl.BlockSpec((H2, H1), lambda i: (0, 0)),         # w2
            pl.BlockSpec((H2, 1), lambda i: (0, 0)),          # b2
            pl.BlockSpec((OUT, H2), lambda i: (0, 0)),        # w3
            pl.BlockSpec((OUT, 1), lambda i: (0, 0)),         # b3
        ],
        out_specs=pl.BlockSpec((OUT, TB), lambda i: (0, i)),
        compiler_params=pltpu.CompilerParams(
            dimension_semantics=("parallel",)),               # batch tiles are independent
    )(xt, w1, b1, w2, b2, w3, b3)
    return out_t[:, :B].T


blob_classification_jit = jax.jit(blob_classification)


def init_params(key):
    # Deterministic init mimicking nn.Linear's uniform(-1/sqrt(fan_in), 1/sqrt(fan_in)).
    # Weights stored PyTorch-style (out_features, in_features), biases (out_features, 1).
    ks = jax.random.split(key, 6)

    def lin(kw, kb, fan_in, fan_out):
        bound = fan_in ** -0.5
        w = jax.random.uniform(kw, (fan_out, fan_in), jnp.float32, -bound, bound)
        b = jax.random.uniform(kb, (fan_out, 1), jnp.float32, -bound, bound)
        return w, b

    w1, b1 = lin(ks[0], ks[1], FEATURES, H1)
    w2, b2 = lin(ks[2], ks[3], H1, H2)
    w3, b3 = lin(ks[4], ks[5], H2, OUT)
    return (w1, b1, w2, b2, w3, b3)


def reference(x, params):
    w1, b1, w2, b2, w3, b3 = params
    hp = jax.lax.Precision.HIGHEST
    h1 = jnp.maximum(jnp.dot(x, w1.T, precision=hp) + b1.T, 0.0)
    h2 = jnp.maximum(jnp.dot(h1, w2.T, precision=hp) + b2.T, 0.0)
    return jnp.dot(h2, w3.T, precision=hp) + b3.T


if __name__ == "__main__":
    key = jax.random.PRNGKey(0)
    kx, kp = jax.random.split(key)
    batch = 8
    x = jax.random.normal(kx, (batch, FEATURES), jnp.float32)
    params = init_params(kp)

    out = jax.block_until_ready(blob_classification_jit(x, params))

    ref = reference(x, params)
    assert out.shape == (batch, OUT)
    assert jnp.allclose(out, ref, atol=1e-5, rtol=1e-4), float(jnp.max(jnp.abs(out - ref)))
    print("KERNEL_OK")
</pallas_src>

<mosaic_0001>
module attributes {stable_mosaic.version = 11 : i64} {
  func.func @mlp_kernel(%arg0: i32, %arg1: memref<2x128xf32, #tpu.memory_space<vmem>>, %arg2: memref<20x2xf32, #tpu.memory_space<vmem>>, %arg3: memref<20x1xf32, #tpu.memory_space<vmem>>, %arg4: memref<10x20xf32, #tpu.memory_space<vmem>>, %arg5: memref<10x1xf32, #tpu.memory_space<vmem>>, %arg6: memref<4x10xf32, #tpu.memory_space<vmem>>, %arg7: memref<4x1xf32, #tpu.memory_space<vmem>>, %arg8: memref<4x128xf32, #tpu.memory_space<vmem>>) attributes {dimension_semantics = [#tpu.dimension_semantics<parallel>], iteration_bounds = array<i64: 1>, scalar_prefetch = 0 : i64, scratch_operands = 0 : i64, tpu.core_type = #tpu.core_type<tc>, window_params = [{transform_indices = @transform_0, window_bounds = array<i64: 2, 128>}, {pipeline_mode = #tpu.pipeline_mode<synchronous>, transform_indices = @transform_1, window_bounds = array<i64: 20, 2>}, {pipeline_mode = #tpu.pipeline_mode<synchronous>, transform_indices = @transform_2, window_bounds = array<i64: 20, 1>}, {pipeline_mode = #tpu.pipeline_mode<synchronous>, transform_indices = @transform_3, window_bounds = array<i64: 10, 20>}, {pipeline_mode = #tpu.pipeline_mode<synchronous>, transform_indices = @transform_4, window_bounds = array<i64: 10, 1>}, {pipeline_mode = #tpu.pipeline_mode<synchronous>, transform_indices = @transform_5, window_bounds = array<i64: 4, 10>}, {pipeline_mode = #tpu.pipeline_mode<synchronous>, transform_indices = @transform_6, window_bounds = array<i64: 4, 1>}, {transform_indices = @transform_7, window_bounds = array<i64: 4, 128>}]} {
    %c0 = arith.constant 0 : index
    %c0_0 = arith.constant 0 : index
    %0 = vector.load %arg1[%c0, %c0_0] : memref<2x128xf32, #tpu.memory_space<vmem>>, vector<2x128xf32>
    %c0_1 = arith.constant 0 : index
    %c0_2 = arith.constant 0 : index
    %1 = vector.load %arg2[%c0_1, %c0_2] : memref<20x2xf32, #tpu.memory_space<vmem>>, vector<20x2xf32>
    %c0_3 = arith.constant 0 : index
    %c0_4 = arith.constant 0 : index
    %2 = vector.load %arg3[%c0_3, %c0_4] : memref<20x1xf32, #tpu.memory_space<vmem>>, vector<20x1xf32>
    %3 = vector.extract_strided_slice %1 {offsets = [0, 0], sizes = [20, 1], strides = [1, 1]} : vector<20x2xf32> to vector<20x1xf32>
    %4 = vector.extract_strided_slice %0 {offsets = [0, 0], sizes = [1, 128], strides = [1, 1]} : vector<2x128xf32> to vector<1x128xf32>
    %5 = vector.broadcast %3 : vector<20x1xf32> to vector<20x128xf32>
    %6 = vector.broadcast %4 : vector<1x128xf32> to vector<20x128xf32>
    %7 = arith.mulf %5, %6 : vector<20x128xf32>
    %8 = vector.broadcast %2 : vector<20x1xf32> to vector<20x128xf32>
    %9 = arith.addf %8, %7 : vector<20x128xf32>
    %10 = vector.extract_strided_slice %1 {offsets = [0, 1], sizes = [20, 1], strides = [1, 1]} : vector<20x2xf32> to vector<20x1xf32>
    %11 = vector.extract_strided_slice %0 {offsets = [1, 0], sizes = [1, 128], strides = [1, 1]} : vector<2x128xf32> to vector<1x128xf32>
    %12 = vector.broadcast %10 : vector<20x1xf32> to vector<20x128xf32>
    %13 = vector.broadcast %11 : vector<1x128xf32> to vector<20x128xf32>
    %14 = arith.mulf %12, %13 : vector<20x128xf32>
    %15 = arith.addf %9, %14 : vector<20x128xf32>
    %cst = arith.constant 0.000000e+00 : f32
    %16 = vector.broadcast %cst : f32 to vector<20x128xf32>
    %17 = arith.maximumf %15, %16 : vector<20x128xf32>
    %c0_5 = arith.constant 0 : index
    %c0_6 = arith.constant 0 : index
    %18 = vector.load %arg4[%c0_5, %c0_6] : memref<10x20xf32, #tpu.memory_space<vmem>>, vector<10x20xf32>
    %c0_7 = arith.constant 0 : index
    %c0_8 = arith.constant 0 : index
    %19 = vector.load %arg5[%c0_7, %c0_8] : memref<10x1xf32, #tpu.memory_space<vmem>>, vector<10x1xf32>
    %20 = vector.extract_strided_slice %18 {offsets = [0, 0], sizes = [10, 1], strides = [1, 1]} : vector<10x20xf32> to vector<10x1xf32>
    %21 = vector.extract_strided_slice %17 {offsets = [0, 0], sizes = [1, 128], strides = [1, 1]} : vector<20x128xf32> to vector<1x128xf32>
    %22 = vector.broadcast %20 : vector<10x1xf32> to vector<10x128xf32>
    %23 = vector.broadcast %21 : vector<1x128xf32> to vector<10x128xf32>
    %24 = arith.mulf %22, %23 : vector<10x128xf32>
    %25 = vector.broadcast %19 : vector<10x1xf32> to vector<10x128xf32>
    %26 = arith.addf %25, %24 : vector<10x128xf32>
    %27 = vector.extract_strided_slice %18 {offsets = [0, 1], sizes = [10, 1], strides = [1, 1]} : vector<10x20xf32> to vector<10x1xf32>
    %28 = vector.extract_strided_slice %17 {offsets = [1, 0], sizes = [1, 128], strides = [1, 1]} : vector<20x128xf32> to vector<1x128xf32>
    %29 = vector.broadcast %27 : vector<10x1xf32> to vector<10x128xf32>
    %30 = vector.broadcast %28 : vector<1x128xf32> to vector<10x128xf32>
    %31 = arith.mulf %29, %30 : vector<10x128xf32>
    %32 = arith.addf %26, %31 : vector<10x128xf32>
    %33 = vector.extract_strided_slice %18 {offsets = [0, 2], sizes = [10, 1], strides = [1, 1]} : vector<10x20xf32> to vector<10x1xf32>
    %34 = vector.extract_strided_slice %17 {offsets = [2, 0], sizes = [1, 128], strides = [1, 1]} : vector<20x128xf32> to vector<1x128xf32>
    %35 = vector.broadcast %33 : vector<10x1xf32> to vector<10x128xf32>
    %36 = vector.broadcast %34 : vector<1x128xf32> to vector<10x128xf32>
    %37 = arith.mulf %35, %36 : vector<10x128xf32>
    %38 = arith.addf %32, %37 : vector<10x128xf32>
    %39 = vector.extract_strided_slice %18 {offsets = [0, 3], sizes = [10, 1], strides = [1, 1]} : vector<10x20xf32> to vector<10x1xf32>
    %40 = vector.extract_strided_slice %17 {offsets = [3, 0], sizes = [1, 128], strides = [1, 1]} : vector<20x128xf32> to vector<1x128xf32>
    %41 = vector.broadcast %39 : vector<10x1xf32> to vector<10x128xf32>
    %42 = vector.broadcast %40 : vector<1x128xf32> to vector<10x128xf32>
    %43 = arith.mulf %41, %42 : vector<10x128xf32>
    %44 = arith.addf %38, %43 : vector<10x128xf32>
    %45 = vector.extract_strided_slice %18 {offsets = [0, 4], sizes = [10, 1], strides = [1, 1]} : vector<10x20xf32> to vector<10x1xf32>
    %46 = vector.extract_strided_slice %17 {offsets = [4, 0], sizes = [1, 128], strides = [1, 1]} : vector<20x128xf32> to vector<1x128xf32>
    %47 = vector.broadcast %45 : vector<10x1xf32> to vector<10x128xf32>
    %48 = vector.broadcast %46 : vector<1x128xf32> to vector<10x128xf32>
    %49 = arith.mulf %47, %48 : vector<10x128xf32>
    %50 = arith.addf %44, %49 : vector<10x128xf32>
    %51 = vector.extract_strided_slice %18 {offsets = [0, 5], sizes = [10, 1], strides = [1, 1]} : vector<10x20xf32> to vector<10x1xf32>
    %52 = vector.extract_strided_slice %17 {offsets = [5, 0], sizes = [1, 128], strides = [1, 1]} : vector<20x128xf32> to vector<1x128xf32>
    %53 = vector.broadcast %51 : vector<10x1xf32> to vector<10x128xf32>
    %54 = vector.broadcast %52 : vector<1x128xf32> to vector<10x128xf32>
    %55 = arith.mulf %53, %54 : vector<10x128xf32>
    %56 = arith.addf %50, %55 : vector<10x128xf32>
    %57 = vector.extract_strided_slice %18 {offsets = [0, 6], sizes = [10, 1], strides = [1, 1]} : vector<10x20xf32> to vector<10x1xf32>
    %58 = vector.extract_strided_slice %17 {offsets = [6, 0], sizes = [1, 128], strides = [1, 1]} : vector<20x128xf32> to vector<1x128xf32>
    %59 = vector.broadcast %57 : vector<10x1xf32> to vector<10x128xf32>
    %60 = vector.broadcast %58 : vector<1x128xf32> to vector<10x128xf32>
    %61 = arith.mulf %59, %60 : vector<10x128xf32>
    %62 = arith.addf %56, %61 : vector<10x128xf32>
    %63 = vector.extract_strided_slice %18 {offsets = [0, 7], sizes = [10, 1], strides = [1, 1]} : vector<10x20xf32> to vector<10x1xf32>
    %64 = vector.extract_strided_slice %17 {offsets = [7, 0], sizes = [1, 128], strides = [1, 1]} : vector<20x128xf32> to vector<1x128xf32>
    %65 = vector.broadcast %63 : vector<10x1xf32> to vector<10x128xf32>
    %66 = vector.broadcast %64 : vector<1x128xf32> to vector<10x128xf32>
    %67 = arith.mulf %65, %66 : vector<10x128xf32>
    %68 = arith.addf %62, %67 : vector<10x128xf32>
    %69 = vector.extract_strided_slice %18 {offsets = [0, 8], sizes = [10, 1], strides = [1, 1]} : vector<10x20xf32> to vector<10x1xf32>
    %70 = vector.extract_strided_slice %17 {offsets = [8, 0], sizes = [1, 128], strides = [1, 1]} : vector<20x128xf32> to vector<1x128xf32>
    %71 = vector.broadcast %69 : vector<10x1xf32> to vector<10x128xf32>
    %72 = vector.broadcast %70 : vector<1x128xf32> to vector<10x128xf32>
    %73 = arith.mulf %71, %72 : vector<10x128xf32>
    %74 = arith.addf %68, %73 : vector<10x128xf32>
    %75 = vector.extract_strided_slice %18 {offsets = [0, 9], sizes = [10, 1], strides = [1, 1]} : vector<10x20xf32> to vector<10x1xf32>
    %76 = vector.extract_strided_slice %17 {offsets = [9, 0], sizes = [1, 128], strides = [1, 1]} : vector<20x128xf32> to vector<1x128xf32>
    %77 = vector.broadcast %75 : vector<10x1xf32> to vector<10x128xf32>
    %78 = vector.broadcast %76 : vector<1x128xf32> to vector<10x128xf32>
    %79 = arith.mulf %77, %78 : vector<10x128xf32>
    %80 = arith.addf %74, %79 : vector<10x128xf32>
    %81 = vector.extract_strided_slice %18 {offsets = [0, 10], sizes = [10, 1], strides = [1, 1]} : vector<10x20xf32> to vector<10x1xf32>
    %82 = vector.extract_strided_slice %17 {offsets = [10, 0], sizes = [1, 128], strides = [1, 1]} : vector<20x128xf32> to vector<1x128xf32>
    %83 = vector.broadcast %81 : vector<10x1xf32> to vector<10x128xf32>
    %84 = vector.broadcast %82 : vector<1x128xf32> to vector<10x128xf32>
    %85 = arith.mulf %83, %84 : vector<10x128xf32>
    %86 = arith.addf %80, %85 : vector<10x128xf32>
    %87 = vector.extract_strided_slice %18 {offsets = [0, 11], sizes = [10, 1], strides = [1, 1]} : vector<10x20xf32> to vector<10x1xf32>
    %88 = vector.extract_strided_slice %17 {offsets = [11, 0], sizes = [1, 128], strides = [1, 1]} : vector<20x128xf32> to vector<1x128xf32>
    %89 = vector.broadcast %87 : vector<10x1xf32> to vector<10x128xf32>
    %90 = vector.broadcast %88 : vector<1x128xf32> to vector<10x128xf32>
    %91 = arith.mulf %89, %90 : vector<10x128xf32>
    %92 = arith.addf %86, %91 : vector<10x128xf32>
    %93 = vector.extract_strided_slice %18 {offsets = [0, 12], sizes = [10, 1], strides = [1, 1]} : vector<10x20xf32> to vector<10x1xf32>
    %94 = vector.extract_strided_slice %17 {offsets = [12, 0], sizes = [1, 128], strides = [1, 1]} : vector<20x128xf32> to vector<1x128xf32>
    %95 = vector.broadcast %93 : vector<10x1xf32> to vector<10x128xf32>
    %96 = vector.broadcast %94 : vector<1x128xf32> to vector<10x128xf32>
    %97 = arith.mulf %95, %96 : vector<10x128xf32>
    %98 = arith.addf %92, %97 : vector<10x128xf32>
    %99 = vector.extract_strided_slice %18 {offsets = [0, 13], sizes = [10, 1], strides = [1, 1]} : vector<10x20xf32> to vector<10x1xf32>
    %100 = vector.extract_strided_slice %17 {offsets = [13, 0], sizes = [1, 128], strides = [1, 1]} : vector<20x128xf32> to vector<1x128xf32>
    %101 = vector.broadcast %99 : vector<10x1xf32> to vector<10x128xf32>
    %102 = vector.broadcast %100 : vector<1x128xf32> to vector<10x128xf32>
    %103 = arith.mulf %101, %102 : vector<10x128xf32>
    %104 = arith.addf %98, %103 : vector<10x128xf32>
    %105 = vector.extract_strided_slice %18 {offsets = [0, 14], sizes = [10, 1], strides = [1, 1]} : vector<10x20xf32> to vector<10x1xf32>
    %106 = vector.extract_strided_slice %17 {offsets = [14, 0], sizes = [1, 128], strides = [1, 1]} : vector<20x128xf32> to vector<1x128xf32>
    %107 = vector.broadcast %105 : vector<10x1xf32> to vector<10x128xf32>
    %108 = vector.broadcast %106 : vector<1x128xf32> to vector<10x128xf32>
    %109 = arith.mulf %107, %108 : vector<10x128xf32>
    %110 = arith.addf %104, %109 : vector<10x128xf32>
    %111 = vector.extract_strided_slice %18 {offsets = [0, 15], sizes = [10, 1], strides = [1, 1]} : vector<10x20xf32> to vector<10x1xf32>
    %112 = vector.extract_strided_slice %17 {offsets = [15, 0], sizes = [1, 128], strides = [1, 1]} : vector<20x128xf32> to vector<1x128xf32>
    %113 = vector.broadcast %111 : vector<10x1xf32> to vector<10x128xf32>
    %114 = vector.broadcast %112 : vector<1x128xf32> to vector<10x128xf32>
    %115 = arith.mulf %113, %114 : vector<10x128xf32>
    %116 = arith.addf %110, %115 : vector<10x128xf32>
    %117 = vector.extract_strided_slice %18 {offsets = [0, 16], sizes = [10, 1], strides = [1, 1]} : vector<10x20xf32> to vector<10x1xf32>
    %118 = vector.extract_strided_slice %17 {offsets = [16, 0], sizes = [1, 128], strides = [1, 1]} : vector<20x128xf32> to vector<1x128xf32>
    %119 = vector.broadcast %117 : vector<10x1xf32> to vector<10x128xf32>
    %120 = vector.broadcast %118 : vector<1x128xf32> to vector<10x128xf32>
    %121 = arith.mulf %119, %120 : vector<10x128xf32>
    %122 = arith.addf %116, %121 : vector<10x128xf32>
    %123 = vector.extract_strided_slice %18 {offsets = [0, 17], sizes = [10, 1], strides = [1, 1]} : vector<10x20xf32> to vector<10x1xf32>
    %124 = vector.extract_strided_slice %17 {offsets = [17, 0], sizes = [1, 128], strides = [1, 1]} : vector<20x128xf32> to vector<1x128xf32>
    %125 = vector.broadcast %123 : vector<10x1xf32> to vector<10x128xf32>
    %126 = vector.broadcast %124 : vector<1x128xf32> to vector<10x128xf32>
    %127 = arith.mulf %125, %126 : vector<10x128xf32>
    %128 = arith.addf %122, %127 : vector<10x128xf32>
    %129 = vector.extract_strided_slice %18 {offsets = [0, 18], sizes = [10, 1], strides = [1, 1]} : vector<10x20xf32> to vector<10x1xf32>
    %130 = vector.extract_strided_slice %17 {offsets = [18, 0], sizes = [1, 128], strides = [1, 1]} : vector<20x128xf32> to vector<1x128xf32>
    %131 = vector.broadcast %129 : vector<10x1xf32> to vector<10x128xf32>
    %132 = vector.broadcast %130 : vector<1x128xf32> to vector<10x128xf32>
    %133 = arith.mulf %131, %132 : vector<10x128xf32>
    %134 = arith.addf %128, %133 : vector<10x128xf32>
    %135 = vector.extract_strided_slice %18 {offsets = [0, 19], sizes = [10, 1], strides = [1, 1]} : vector<10x20xf32> to vector<10x1xf32>
    %136 = vector.extract_strided_slice %17 {offsets = [19, 0], sizes = [1, 128], strides = [1, 1]} : vector<20x128xf32> to vector<1x128xf32>
    %137 = vector.broadcast %135 : vector<10x1xf32> to vector<10x128xf32>
    %138 = vector.broadcast %136 : vector<1x128xf32> to vector<10x128xf32>
    %139 = arith.mulf %137, %138 : vector<10x128xf32>
    %140 = arith.addf %134, %139 : vector<10x128xf32>
    %cst_9 = arith.constant 0.000000e+00 : f32
    %141 = vector.broadcast %cst_9 : f32 to vector<10x128xf32>
    %142 = arith.maximumf %140, %141 : vector<10x128xf32>
    %c0_10 = arith.constant 0 : index
    %c0_11 = arith.constant 0 : index
    %143 = vector.load %arg6[%c0_10, %c0_11] : memref<4x10xf32, #tpu.memory_space<vmem>>, vector<4x10xf32>
    %c0_12 = arith.constant 0 : index
    %c0_13 = arith.constant 0 : index
    %144 = vector.load %arg7[%c0_12, %c0_13] : memref<4x1xf32, #tpu.memory_space<vmem>>, vector<4x1xf32>
    %145 = vector.extract_strided_slice %143 {offsets = [0, 0], sizes = [4, 1], strides = [1, 1]} : vector<4x10xf32> to vector<4x1xf32>
    %146 = vector.extract_strided_slice %142 {offsets = [0, 0], sizes = [1, 128], strides = [1, 1]} : vector<10x128xf32> to vector<1x128xf32>
    %147 = vector.broadcast %145 : vector<4x1xf32> to vector<4x128xf32>
    %148 = vector.broadcast %146 : vector<1x128xf32> to vector<4x128xf32>
    %149 = arith.mulf %147, %148 : vector<4x128xf32>
    %150 = vector.broadcast %144 : vector<4x1xf32> to vector<4x128xf32>
    %151 = arith.addf %150, %149 : vector<4x128xf32>
    %152 = vector.extract_strided_slice %143 {offsets = [0, 1], sizes = [4, 1], strides = [1, 1]} : vector<4x10xf32> to vector<4x1xf32>
    %153 = vector.extract_strided_slice %142 {offsets = [1, 0], sizes = [1, 128], strides = [1, 1]} : vector<10x128xf32> to vector<1x128xf32>
    %154 = vector.broadcast %152 : vector<4x1xf32> to vector<4x128xf32>
    %155 = vector.broadcast %153 : vector<1x128xf32> to vector<4x128xf32>
    %156 = arith.mulf %154, %155 : vector<4x128xf32>
    %157 = arith.addf %151, %156 : vector<4x128xf32>
    %158 = vector.extract_strided_slice %143 {offsets = [0, 2], sizes = [4, 1], strides = [1, 1]} : vector<4x10xf32> to vector<4x1xf32>
    %159 = vector.extract_strided_slice %142 {offsets = [2, 0], sizes = [1, 128], strides = [1, 1]} : vector<10x128xf32> to vector<1x128xf32>
    %160 = vector.broadcast %158 : vector<4x1xf32> to vector<4x128xf32>
    %161 = vector.broadcast %159 : vector<1x128xf32> to vector<4x128xf32>
    %162 = arith.mulf %160, %161 : vector<4x128xf32>
    %163 = arith.addf %157, %162 : vector<4x128xf32>
    %164 = vector.extract_strided_slice %143 {offsets = [0, 3], sizes = [4, 1], strides = [1, 1]} : vector<4x10xf32> to vector<4x1xf32>
    %165 = vector.extract_strided_slice %142 {offsets = [3, 0], sizes = [1, 128], strides = [1, 1]} : vector<10x128xf32> to vector<1x128xf32>
    %166 = vector.broadcast %164 : vector<4x1xf32> to vector<4x128xf32>
    %167 = vector.broadcast %165 : vector<1x128xf32> to vector<4x128xf32>
    %168 = arith.mulf %166, %167 : vector<4x128xf32>
    %169 = arith.addf %163, %168 : vector<4x128xf32>
    %170 = vector.extract_strided_slice %143 {offsets = [0, 4], sizes = [4, 1], strides = [1, 1]} : vector<4x10xf32> to vector<4x1xf32>
    %171 = vector.extract_strided_slice %142 {offsets = [4, 0], sizes = [1, 128], strides = [1, 1]} : vector<10x128xf32> to vector<1x128xf32>
    %172 = vector.broadcast %170 : vector<4x1xf32> to vector<4x128xf32>
    %173 = vector.broadcast %171 : vector<1x128xf32> to vector<4x128xf32>
    %174 = arith.mulf %172, %173 : vector<4x128xf32>
    %175 = arith.addf %169, %174 : vector<4x128xf32>
    %176 = vector.extract_strided_slice %143 {offsets = [0, 5], sizes = [4, 1], strides = [1, 1]} : vector<4x10xf32> to vector<4x1xf32>
    %177 = vector.extract_strided_slice %142 {offsets = [5, 0], sizes = [1, 128], strides = [1, 1]} : vector<10x128xf32> to vector<1x128xf32>
    %178 = vector.broadcast %176 : vector<4x1xf32> to vector<4x128xf32>
    %179 = vector.broadcast %177 : vector<1x128xf32> to vector<4x128xf32>
    %180 = arith.mulf %178, %179 : vector<4x128xf32>
    %181 = arith.addf %175, %180 : vector<4x128xf32>
    %182 = vector.extract_strided_slice %143 {offsets = [0, 6], sizes = [4, 1], strides = [1, 1]} : vector<4x10xf32> to vector<4x1xf32>
    %183 = vector.extract_strided_slice %142 {offsets = [6, 0], sizes = [1, 128], strides = [1, 1]} : vector<10x128xf32> to vector<1x128xf32>
    %184 = vector.broadcast %182 : vector<4x1xf32> to vector<4x128xf32>
    %185 = vector.broadcast %183 : vector<1x128xf32> to vector<4x128xf32>
    %186 = arith.mulf %184, %185 : vector<4x128xf32>
    %187 = arith.addf %181, %186 : vector<4x128xf32>
    %188 = vector.extract_strided_slice %143 {offsets = [0, 7], sizes = [4, 1], strides = [1, 1]} : vector<4x10xf32> to vector<4x1xf32>
    %189 = vector.extract_strided_slice %142 {offsets = [7, 0], sizes = [1, 128], strides = [1, 1]} : vector<10x128xf32> to vector<1x128xf32>
    %190 = vector.broadcast %188 : vector<4x1xf32> to vector<4x128xf32>
    %191 = vector.broadcast %189 : vector<1x128xf32> to vector<4x128xf32>
    %192 = arith.mulf %190, %191 : vector<4x128xf32>
    %193 = arith.addf %187, %192 : vector<4x128xf32>
    %194 = vector.extract_strided_slice %143 {offsets = [0, 8], sizes = [4, 1], strides = [1, 1]} : vector<4x10xf32> to vector<4x1xf32>
    %195 = vector.extract_strided_slice %142 {offsets = [8, 0], sizes = [1, 128], strides = [1, 1]} : vector<10x128xf32> to vector<1x128xf32>
    %196 = vector.broadcast %194 : vector<4x1xf32> to vector<4x128xf32>
    %197 = vector.broadcast %195 : vector<1x128xf32> to vector<4x128xf32>
    %198 = arith.mulf %196, %197 : vector<4x128xf32>
    %199 = arith.addf %193, %198 : vector<4x128xf32>
    %200 = vector.extract_strided_slice %143 {offsets = [0, 9], sizes = [4, 1], strides = [1, 1]} : vector<4x10xf32> to vector<4x1xf32>
    %201 = vector.extract_strided_slice %142 {offsets = [9, 0], sizes = [1, 128], strides = [1, 1]} : vector<10x128xf32> to vector<1x128xf32>
    %202 = vector.broadcast %200 : vector<4x1xf32> to vector<4x128xf32>
    %203 = vector.broadcast %201 : vector<1x128xf32> to vector<4x128xf32>
    %204 = arith.mulf %202, %203 : vector<4x128xf32>
    %205 = arith.addf %199, %204 : vector<4x128xf32>
    %c0_14 = arith.constant 0 : index
    %c0_15 = arith.constant 0 : index
    %206 = vector.load %arg8[%c0_14, %c0_15] : memref<4x128xf32, #tpu.memory_space<vmem>>, vector<4x128xf32>
    tpu.vector_store %arg8[%c0_14, %c0_15], %205 {strides = array<i32>} : memref<4x128xf32, #tpu.memory_space<vmem>>, vector<4x128xf32>,
    return
  }
  func.func @transform_0(%arg0: i32) -> (i32, i32) {
    %c0_i32 = arith.constant 0 : i32
    %c0_i32_0 = arith.constant 0 : i32
    return %c0_i32, %arg0 : i32, i32
  }
  func.func @transform_1(%arg0: i32) -> (i32, i32) {
    %c0_i32 = arith.constant 0 : i32
    %c0_i32_0 = arith.constant 0 : i32
    %c0_i32_1 = arith.constant 0 : i32
    return %c0_i32, %c0_i32_0 : i32, i32
  }
  func.func @transform_2(%arg0: i32) -> (i32, i32) {
    %c0_i32 = arith.constant 0 : i32
    %c0_i32_0 = arith.constant 0 : i32
    %c0_i32_1 = arith.constant 0 : i32
    return %c0_i32, %c0_i32_0 : i32, i32
  }
  func.func @transform_3(%arg0: i32) -> (i32, i32) {
    %c0_i32 = arith.constant 0 : i32
    %c0_i32_0 = arith.constant 0 : i32
    %c0_i32_1 = arith.constant 0 : i32
    return %c0_i32, %c0_i32_0 : i32, i32
  }
  func.func @transform_4(%arg0: i32) -> (i32, i32) {
    %c0_i32 = arith.constant 0 : i32
    %c0_i32_0 = arith.constant 0 : i32
    %c0_i32_1 = arith.constant 0 : i32
    return %c0_i32, %c0_i32_0 : i32, i32
  }
  func.func @transform_5(%arg0: i32) -> (i32, i32) {
    %c0_i32 = arith.constant 0 : i32
    %c0_i32_0 = arith.constant 0 : i32
    %c0_i32_1 = arith.constant 0 : i32
    return %c0_i32, %c0_i32_0 : i32, i32
  }
  func.func @transform_6(%arg0: i32) -> (i32, i32) {
    %c0_i32 = arith.constant 0 : i32
    %c0_i32_0 = arith.constant 0 : i32
    %c0_i32_1 = arith.constant 0 : i32
    return %c0_i32, %c0_i32_0 : i32, i32
  }
  func.func @transform_7(%arg0: i32) -> (i32, i32) {
    %c0_i32 = arith.constant 0 : i32
    %c0_i32_0 = arith.constant 0 : i32
    return %c0_i32, %arg0 : i32, i32
  }
}

</mosaic_0001>

<llo_original>
// kernel: blob_classification.1
$region0: #{blob_classification.1}
  #allocation0 [shape = 'u32[]', space=smem, size = 0x4, offset = 0x4, fixed_abs, tag = 'smem constant byte address 0x4 - core index']
  #allocation1 [shape = 'u32[144,128]{1,0:T(1,128)}', space=vmem, size = 0x12000, scoped, tag = 'internal scratch']
  %s0 = inlined_call_operand.vmem [shape: f32[2,128], index: 0, kind: input, shape index: {}]
  %s1 = inlined_call_operand.vmem [shape: f32[20,2], index: 1, kind: input, shape index: {}]
  %s2 = inlined_call_operand.vmem [shape: f32[20,1], index: 2, kind: input, shape index: {}]
  %s3 = inlined_call_operand.vmem [shape: f32[10,20], index: 3, kind: input, shape index: {}]
  %s4 = inlined_call_operand.vmem [shape: f32[10,1], index: 4, kind: input, shape index: {}]
  %s5 = inlined_call_operand.vmem [shape: f32[4,10], index: 5, kind: input, shape index: {}]
  %s6 = inlined_call_operand.vmem [shape: f32[4,1], index: 6, kind: input, shape index: {}]
  %s7 = inlined_call_operand.vmem [shape: f32[4,128], index: 7, kind: output, shape index: {}]
  %s8 = sld [smem:[#allocation0]]
  $region38: #{blob_classification.1} parent=0
    _
  %s10 = ssub.s32 1, %s8
  %s11 = scalar_select 0, %s10, %s8
  // Predicated region
  $region2: #{blob_classification.1} parent=0 // pred_check
    _
  $region3: #{blob_classification.1} parent=0 // pred_check_branch
    %13 = sbr.rel (0) target = $region5
  $region4: #{blob_classification.1} parent=0 // pred_region
    _
  $region5: #{blob_classification.1} parent=0 // pred_fallthru
    _
  // Predicated region
  $region6: #{blob_classification.1} parent=0 // pred_check
    _
  $region7: #{blob_classification.1} parent=0 // pred_check_branch
    %15 = sbr.rel (0) target = $region9
  $region8: #{blob_classification.1} parent=0 // pred_region
    _
  $region9: #{blob_classification.1} parent=0 // pred_fallthru
    _
  // Predicated region
  $region10: #{blob_classification.1} parent=0 // pred_check
    _
  $region11: #{blob_classification.1} parent=0 // pred_check_branch
    %17 = sbr.rel (0) target = $region13
  $region12: #{blob_classification.1} parent=0 // pred_region
    _
  $region13: #{blob_classification.1} parent=0 // pred_fallthru
    _
  // Predicated region
  $region14: #{blob_classification.1} parent=0 // pred_check
    _
  $region15: #{blob_classification.1} parent=0 // pred_check_branch
    %19 = sbr.rel (0) target = $region17
  $region16: #{blob_classification.1} parent=0 // pred_region
    _
  $region17: #{blob_classification.1} parent=0 // pred_fallthru
    _
  // Predicated region
  $region18: #{blob_classification.1} parent=0 // pred_check
    _
  $region19: #{blob_classification.1} parent=0 // pred_check_branch
    %21 = sbr.rel (0) target = $region21
  $region20: #{blob_classification.1} parent=0 // pred_region
    _
  $region21: #{blob_classification.1} parent=0 // pred_fallthru
    _
  // Predicated region
  $region22: #{blob_classification.1} parent=0 // pred_check
    _
  $region23: #{blob_classification.1} parent=0 // pred_check_branch
    %23 = sbr.rel (0) target = $region25
  $region24: #{blob_classification.1} parent=0 // pred_region
    _
  $region25: #{blob_classification.1} parent=0 // pred_fallthru
    _
  // Predicated region
  $region26: #{blob_classification.1} parent=0 // pred_check
    _
  $region27: #{blob_classification.1} parent=0 // pred_check_branch
    %25 = sbr.rel (0) target = $region29
  $region28: #{blob_classification.1} parent=0 // pred_region
    _
  $region29: #{blob_classification.1} parent=0 // pred_fallthru
    _
  %v26 = vld [vmem:[%s0] sm:$0x3]
  %v27 = vld [vmem:[%s1] sm:$0xff]
  %v28 = vld [vmem:[%s1 + $0x8] sm:$0xff]
  %v29 = vld [vmem:[%s1 + $0x10] sm:$0xf]
  %v30 = vld [vmem:[%s2] sm:$0xff]
  %v31 = vld [vmem:[%s2 + $0x8] sm:$0xff]
  %v32 = vld [vmem:[%s2 + $0x10] sm:$0xf]
  %34 = vset.pattern.permute.xlu0 0
  %35 = vperm.xlu0 %34, %v27
  %v36 = vpop.permute.xlu0 %35
  %39 = vset.pattern.permute.xlu0 0
  %40 = vperm.xlu0 %39, %v28
  %v41 = vpop.permute.xlu0 %40
  %44 = vset.pattern.permute.xlu0 0
  %45 = vperm.xlu0 %44, %v29
  %v46 = vpop.permute.xlu0 %45
  %v48 = vlaneseq
  %v49 = vshrl.u32 %v48, 7
  %v50 = vsub.s32 0, %v49
  %v51 = vrot.slane %v26, %v50
  %v52 = vmul.f32 %v36, %v51
  %v53 = vmul.f32 %v41, %v51
  %v54 = vmul.f32 %v46, %v51
  %56 = vset.pattern.permute.xlu0 0
  %57 = vperm.xlu0 %56, %v30
  %v58 = vpop.permute.xlu0 %57
  %61 = vset.pattern.permute.xlu0 0
  %62 = vperm.xlu0 %61, %v31
  %v63 = vpop.permute.xlu0 %62
  %66 = vset.pattern.permute.xlu0 0
  %67 = vperm.xlu0 %66, %v32
  %v68 = vpop.permute.xlu0 %67
  %v70 = vadd.f32 %v58, %v52
  %v71 = vadd.f32 %v63, %v53
  %v72 = vadd.f32 %v68, %v54
  %73 = vset.pattern.permute.xlu0 1
  %74 = vperm.xlu0 %73, %v27
  %v75 = vpop.permute.xlu0 %74
  %77 = vset.pattern.permute.xlu0 1
  %78 = vperm.xlu0 %77, %v28
  %v79 = vpop.permute.xlu0 %78
  %81 = vset.pattern.permute.xlu0 1
  %82 = vperm.xlu0 %81, %v29
  %v83 = vpop.permute.xlu0 %82
  %v85 = vlaneseq
  %v86 = vshrl.u32 %v85, 7
  %v87 = vsub.s32 1, %v86
  %v88 = vrot.slane %v26, %v87
  %v89 = vmul.f32 %v75, %v88
  %v90 = vmul.f32 %v79, %v88
  %v91 = vmul.f32 %v83, %v88
  %v92 = vadd.f32 %v70, %v89
  %v93 = vadd.f32 %v71, %v90
  %v94 = vadd.f32 %v72, %v91
  %v95 = vmax.f32 %v92, 0.0
  %v96 = vmax.f32 %v93, 0.0
  %v97 = vmax.f32 %v94, 0.0
  %v98 = vld [vmem:[%s3] sm:$0xff]
  %v99 = vld [vmem:[%s3 + $0x8] sm:$0x3]
  %v100 = vld [vmem:[%s4] sm:$0xff]
  %v101 = vld [vmem:[%s4 + $0x8] sm:$0x3]
  %103 = vset.pattern.permute.xlu0 0
  %104 = vperm.xlu0 %103, %v98
  %v105 = vpop.permute.xlu0 %104
  %108 = vset.pattern.permute.xlu0 0
  %109 = vperm.xlu0 %108, %v99
  %v110 = vpop.permute.xlu0 %109
  %v112 = vlaneseq
  %v113 = vshrl.u32 %v112, 7
  %v114 = vsub.s32 0, %v113
  %v115 = vrot.slane %v95, %v114
  %v116 = vmul.f32 %v105, %v115
  %v117 = vmul.f32 %v110, %v115
  %119 = vset.pattern.permute.xlu0 0
  %120 = vperm.xlu0 %119, %v100
  %v121 = vpop.permute.xlu0 %120
  %124 = vset.pattern.permute.xlu0 0
  %125 = vperm.xlu0 %124, %v101
  %v126 = vpop.permute.xlu0 %125
  %v128 = vadd.f32 %v121, %v116
  %v129 = vadd.f32 %v126, %v117
  %130 = vset.pattern.permute.xlu0 1
  %131 = vperm.xlu0 %130, %v98
  %v132 = vpop.permute.xlu0 %131
  %134 = vset.pattern.permute.xlu0 1
  %135 = vperm.xlu0 %134, %v99
  %v136 = vpop.permute.xlu0 %135
  %v138 = vlaneseq
  %v139 = vshrl.u32 %v138, 7
  %v140 = vsub.s32 1, %v139
  %v141 = vrot.slane %v95, %v140
  %v142 = vmul.f32 %v132, %v141
  %v143 = vmul.f32 %v136, %v141
  %v144 = vadd.f32 %v128, %v142
  %v145 = vadd.f32 %v129, %v143
  %146 = vset.pattern.permute.xlu0 2
  %147 = vperm.xlu0 %146, %v98
  %v148 = vpop.permute.xlu0 %147
  %150 = vset.pattern.permute.xlu0 2
  %151 = vperm.xlu0 %150, %v99
  %v152 = vpop.permute.xlu0 %151
  %v154 = vlaneseq
  %v155 = vshrl.u32 %v154, 7
  %v156 = vsub.s32 2, %v155
  %v157 = vrot.slane %v95, %v156
  %v158 = vmul.f32 %v148, %v157
  %v159 = vmul.f32 %v152, %v157
  %v160 = vadd.f32 %v144, %v158
  %v161 = vadd.f32 %v145, %v159
  %162 = vset.pattern.permute.xlu0 3
  %163 = vperm.xlu0 %162, %v98
  %v164 = vpop.permute.xlu0 %163
  %166 = vset.pattern.permute.xlu0 3
  %167 = vperm.xlu0 %166, %v99
  %v168 = vpop.permute.xlu0 %167
  %v170 = vlaneseq
  %v171 = vshrl.u32 %v170, 7
  %v172 = vsub.s32 3, %v171
  %v173 = vrot.slane %v95, %v172
  %v174 = vmul.f32 %v164, %v173
  %v175 = vmul.f32 %v168, %v173
  %v176 = vadd.f32 %v160, %v174
  %v177 = vadd.f32 %v161, %v175
  %178 = vset.pattern.permute.xlu0 4
  %179 = vperm.xlu0 %178, %v98
  %v180 = vpop.permute.xlu0 %179
  %182 = vset.pattern.permute.xlu0 4
  %183 = vperm.xlu0 %182, %v99
  %v184 = vpop.permute.xlu0 %183
  %v186 = vlaneseq
  %v187 = vshrl.u32 %v186, 7
  %v188 = vsub.s32 4, %v187
  %v189 = vrot.slane %v95, %v188
  %v190 = vmul.f32 %v180, %v189
  %v191 = vmul.f32 %v184, %v189
  %v192 = vadd.f32 %v176, %v190
  %v193 = vadd.f32 %v177, %v191
  %194 = vset.pattern.permute.xlu0 5
  %195 = vperm.xlu0 %194, %v98
  %v196 = vpop.permute.xlu0 %195
  %198 = vset.pattern.permute.xlu0 5
  %199 = vperm.xlu0 %198, %v99
  %v200 = vpop.permute.xlu0 %199
  %v202 = vlaneseq
  %v203 = vshrl.u32 %v202, 7
  %v204 = vsub.s32 5, %v203
  %v205 = vrot.slane %v95, %v204
  %v206 = vmul.f32 %v196, %v205
  %v207 = vmul.f32 %v200, %v205
  %v208 = vadd.f32 %v192, %v206
  %v209 = vadd.f32 %v193, %v207
  %210 = vset.pattern.permute.xlu0 6
  %211 = vperm.xlu0 %210, %v98
  %v212 = vpop.permute.xlu0 %211
  %214 = vset.pattern.permute.xlu0 6
  %215 = vperm.xlu0 %214, %v99
  %v216 = vpop.permute.xlu0 %215
  %v218 = vlaneseq
  %v219 = vshrl.u32 %v218, 7
  %v220 = vsub.s32 6, %v219
  %v221 = vrot.slane %v95, %v220
  %v222 = vmul.f32 %v212, %v221
  %v223 = vmul.f32 %v216, %v221
  %v224 = vadd.f32 %v208, %v222
  %v225 = vadd.f32 %v209, %v223
  %226 = vset.pattern.permute.xlu0 7
  %227 = vperm.xlu0 %226, %v98
  %v228 = vpop.permute.xlu0 %227
  %230 = vset.pattern.permute.xlu0 7
  %231 = vperm.xlu0 %230, %v99
  %v232 = vpop.permute.xlu0 %231
  %v234 = vlaneseq
  %v235 = vshrl.u32 %v234, 7
  %v236 = vsub.s32 7, %v235
  %v237 = vrot.slane %v95, %v236
  %v238 = vmul.f32 %v228, %v237
  %v239 = vmul.f32 %v232, %v237
  %v240 = vadd.f32 %v224, %v238
  %v241 = vadd.f32 %v225, %v239
  %242 = vset.pattern.permute.xlu0 8
  %243 = vperm.xlu0 %242, %v98
  %v244 = vpop.permute.xlu0 %243
  %246 = vset.pattern.permute.xlu0 8
  %247 = vperm.xlu0 %246, %v99
  %v248 = vpop.permute.xlu0 %247
  %v250 = vlaneseq
  %v251 = vshrl.u32 %v250, 7
  %v252 = vsub.s32 0, %v251
  %v253 = vrot.slane %v96, %v252
  %v254 = vmul.f32 %v244, %v253
  %v255 = vmul.f32 %v248, %v253
  %v256 = vadd.f32 %v240, %v254
  %v257 = vadd.f32 %v241, %v255
  %258 = vset.pattern.permute.xlu0 9
  %259 = vperm.xlu0 %258, %v98
  %v260 = vpop.permute.xlu0 %259
  %262 = vset.pattern.permute.xlu0 9
  %263 = vperm.xlu0 %262, %v99
  %v264 = vpop.permute.xlu0 %263
  %v266 = vlaneseq
  %v267 = vshrl.u32 %v266, 7
  %v268 = vsub.s32 1, %v267
  %v269 = vrot.slane %v96, %v268
  %v270 = vmul.f32 %v260, %v269
  %v271 = vmul.f32 %v264, %v269
  %v272 = vadd.f32 %v256, %v270
  %v273 = vadd.f32 %v257, %v271
  %274 = vset.pattern.permute.xlu0 10
  %275 = vperm.xlu0 %274, %v98
  %v276 = vpop.permute.xlu0 %275
  %278 = vset.pattern.permute.xlu0 10
  %279 = vperm.xlu0 %278, %v99
  %v280 = vpop.permute.xlu0 %279
  %v282 = vlaneseq
  %v283 = vshrl.u32 %v282, 7
  %v284 = vsub.s32 2, %v283
  %v285 = vrot.slane %v96, %v284
  %v286 = vmul.f32 %v276, %v285
  %v287 = vmul.f32 %v280, %v285
  %v288 = vadd.f32 %v272, %v286
  %v289 = vadd.f32 %v273, %v287
  %290 = vset.pattern.permute.xlu0 11
  %291 = vperm.xlu0 %290, %v98
  %v292 = vpop.permute.xlu0 %291
  %294 = vset.pattern.permute.xlu0 11
  %295 = vperm.xlu0 %294, %v99
  %v296 = vpop.permute.xlu0 %295
  %v298 = vlaneseq
  %v299 = vshrl.u32 %v298, 7
  %v300 = vsub.s32 3, %v299
  %v301 = vrot.slane %v96, %v300
  %v302 = vmul.f32 %v292, %v301
  %v303 = vmul.f32 %v296, %v301
  %v304 = vadd.f32 %v288, %v302
  %v305 = vadd.f32 %v289, %v303
  %306 = vset.pattern.permute.xlu0 12
  %307 = vperm.xlu0 %306, %v98
  %v308 = vpop.permute.xlu0 %307
  %310 = vset.pattern.permute.xlu0 12
  %311 = vperm.xlu0 %310, %v99
  %v312 = vpop.permute.xlu0 %311
  %v314 = vlaneseq
  %v315 = vshrl.u32 %v314, 7
  %v316 = vsub.s32 4, %v315
  %v317 = vrot.slane %v96, %v316
  %v318 = vmul.f32 %v308, %v317
  %v319 = vmul.f32 %v312, %v317
  %v320 = vadd.f32 %v304, %v318
  %v321 = vadd.f32 %v305, %v319
  %322 = vset.pattern.permute.xlu0 13
  %323 = vperm.xlu0 %322, %v98
  %v324 = vpop.permute.xlu0 %323
  %326 = vset.pattern.permute.xlu0 13
  %327 = vperm.xlu0 %326, %v99
  %v328 = vpop.permute.xlu0 %327
  %v330 = vlaneseq
  %v331 = vshrl.u32 %v330, 7
  %v332 = vsub.s32 5, %v331
  %v333 = vrot.slane %v96, %v332
  %v334 = vmul.f32 %v324, %v333
  %v335 = vmul.f32 %v328, %v333
  %v336 = vadd.f32 %v320, %v334
  %v337 = vadd.f32 %v321, %v335
  %338 = vset.pattern.permute.xlu0 14
  %339 = vperm.xlu0 %338, %v98
  %v340 = vpop.permute.xlu0 %339
  %342 = vset.pattern.permute.xlu0 14
  %343 = vperm.xlu0 %342, %v99
  %v344 = vpop.permute.xlu0 %343
  %v346 = vlaneseq
  %v347 = vshrl.u32 %v346, 7
  %v348 = vsub.s32 6, %v347
  %v349 = vrot.slane %v96, %v348
  %v350 = vmul.f32 %v340, %v349
  %v351 = vmul.f32 %v344, %v349
  %v352 = vadd.f32 %v336, %v350
  %v353 = vadd.f32 %v337, %v351
  %354 = vset.pattern.permute.xlu0 15
  %355 = vperm.xlu0 %354, %v98
  %v356 = vpop.permute.xlu0 %355
  %358 = vset.pattern.permute.xlu0 15
  %359 = vperm.xlu0 %358, %v99
  %v360 = vpop.permute.xlu0 %359
  %v362 = vlaneseq
  %v363 = vshrl.u32 %v362, 7
  %v364 = vsub.s32 7, %v363
  %v365 = vrot.slane %v96, %v364
  %v366 = vmul.f32 %v356, %v365
  %v367 = vmul.f32 %v360, %v365
  %v368 = vadd.f32 %v352, %v366
  %v369 = vadd.f32 %v353, %v367
  %370 = vset.pattern.permute.xlu0 16
  %371 = vperm.xlu0 %370, %v98
  %v372 = vpop.permute.xlu0 %371
  %374 = vset.pattern.permute.xlu0 16
  %375 = vperm.xlu0 %374, %v99
  %v376 = vpop.permute.xlu0 %375
  %v378 = vlaneseq
  %v379 = vshrl.u32 %v378, 7
  %v380 = vsub.s32 0, %v379
  %v381 = vrot.slane %v97, %v380
  %v382 = vmul.f32 %v372, %v381
  %v383 = vmul.f32 %v376, %v381
  %v384 = vadd.f32 %v368, %v382
  %v385 = vadd.f32 %v369, %v383
  %386 = vset.pattern.permute.xlu0 17
  %387 = vperm.xlu0 %386, %v98
  %v388 = vpop.permute.xlu0 %387
  %390 = vset.pattern.permute.xlu0 17
  %391 = vperm.xlu0 %390, %v99
  %v392 = vpop.permute.xlu0 %391
  %v394 = vlaneseq
  %v395 = vshrl.u32 %v394, 7
  %v396 = vsub.s32 1, %v395
  %v397 = vrot.slane %v97, %v396
  %v398 = vmul.f32 %v388, %v397
  %v399 = vmul.f32 %v392, %v397
  %v400 = vadd.f32 %v384, %v398
  %v401 = vadd.f32 %v385, %v399
  %402 = vset.pattern.permute.xlu0 18
  %403 = vperm.xlu0 %402, %v98
  %v404 = vpop.permute.xlu0 %403
  %406 = vset.pattern.permute.xlu0 18
  %407 = vperm.xlu0 %406, %v99
  %v408 = vpop.permute.xlu0 %407
  %v410 = vlaneseq
  %v411 = vshrl.u32 %v410, 7
  %v412 = vsub.s32 2, %v411
  %v413 = vrot.slane %v97, %v412
  %v414 = vmul.f32 %v404, %v413
  %v415 = vmul.f32 %v408, %v413
  %v416 = vadd.f32 %v400, %v414
  %v417 = vadd.f32 %v401, %v415
  %418 = vset.pattern.permute.xlu0 19
  %419 = vperm.xlu0 %418, %v98
  %v420 = vpop.permute.xlu0 %419
  %422 = vset.pattern.permute.xlu0 19
  %423 = vperm.xlu0 %422, %v99
  %v424 = vpop.permute.xlu0 %423
  %v426 = vlaneseq
  %v427 = vshrl.u32 %v426, 7
  %v428 = vsub.s32 3, %v427
  %v429 = vrot.slane %v97, %v428
  %v430 = vmul.f32 %v420, %v429
  %v431 = vmul.f32 %v424, %v429
  %v432 = vadd.f32 %v416, %v430
  %v433 = vadd.f32 %v417, %v431
  %v434 = vmax.f32 %v432, 0.0
  %v435 = vmax.f32 %v433, 0.0
  %v436 = vld [vmem:[%s5] sm:$0xf]
  %v437 = vld [vmem:[%s6] sm:$0xf]
  %439 = vset.pattern.permute.xlu0 0
  %440 = vperm.xlu0 %439, %v436
  %v441 = vpop.permute.xlu0 %440
  %v443 = vlaneseq
  %v444 = vshrl.u32 %v443, 7
  %v445 = vsub.s32 0, %v444
  %v446 = vrot.slane %v434, %v445
  %v447 = vmul.f32 %v441, %v446
  %449 = vset.pattern.permute.xlu0 0
  %450 = vperm.xlu0 %449, %v437
  %v451 = vpop.permute.xlu0 %450
  %v453 = vadd.f32 %v451, %v447
  %454 = vset.pattern.permute.xlu0 1
  %455 = vperm.xlu0 %454, %v436
  %v456 = vpop.permute.xlu0 %455
  %v458 = vlaneseq
  %v459 = vshrl.u32 %v458, 7
  %v460 = vsub.s32 1, %v459
  %v461 = vrot.slane %v434, %v460
  %v462 = vmul.f32 %v456, %v461
  %v463 = vadd.f32 %v453, %v462
  %464 = vset.pattern.permute.xlu0 2
  %465 = vperm.xlu0 %464, %v436
  %v466 = vpop.permute.xlu0 %465
  %v468 = vlaneseq
  %v469 = vshrl.u32 %v468, 7
  %v470 = vsub.s32 2, %v469
  %v471 = vrot.slane %v434, %v470
  %v472 = vmul.f32 %v466, %v471
  %v473 = vadd.f32 %v463, %v472
  %474 = vset.pattern.permute.xlu0 3
  %475 = vperm.xlu0 %474, %v436
  %v476 = vpop.permute.xlu0 %475
  %v478 = vlaneseq
  %v479 = vshrl.u32 %v478, 7
  %v480 = vsub.s32 3, %v479
  %v481 = vrot.slane %v434, %v480
  %v482 = vmul.f32 %v476, %v481
  %v483 = vadd.f32 %v473, %v482
  %484 = vset.pattern.permute.xlu0 4
  %485 = vperm.xlu0 %484, %v436
  %v486 = vpop.permute.xlu0 %485
  %v488 = vlaneseq
  %v489 = vshrl.u32 %v488, 7
  %v490 = vsub.s32 4, %v489
  %v491 = vrot.slane %v434, %v490
  %v492 = vmul.f32 %v486, %v491
  %v493 = vadd.f32 %v483, %v492
  %494 = vset.pattern.permute.xlu0 5
  %495 = vperm.xlu0 %494, %v436
  %v496 = vpop.permute.xlu0 %495
  %v498 = vlaneseq
  %v499 = vshrl.u32 %v498, 7
  %v500 = vsub.s32 5, %v499
  %v501 = vrot.slane %v434, %v500
  %v502 = vmul.f32 %v496, %v501
  %v503 = vadd.f32 %v493, %v502
  %504 = vset.pattern.permute.xlu0 6
  %505 = vperm.xlu0 %504, %v436
  %v506 = vpop.permute.xlu0 %505
  %v508 = vlaneseq
  %v509 = vshrl.u32 %v508, 7
  %v510 = vsub.s32 6, %v509
  %v511 = vrot.slane %v434, %v510
  %v512 = vmul.f32 %v506, %v511
  %v513 = vadd.f32 %v503, %v512
  %514 = vset.pattern.permute.xlu0 7
  %515 = vperm.xlu0 %514, %v436
  %v516 = vpop.permute.xlu0 %515
  %v518 = vlaneseq
  %v519 = vshrl.u32 %v518, 7
  %v520 = vsub.s32 7, %v519
  %v521 = vrot.slane %v434, %v520
  %v522 = vmul.f32 %v516, %v521
  %v523 = vadd.f32 %v513, %v522
  %524 = vset.pattern.permute.xlu0 8
  %525 = vperm.xlu0 %524, %v436
  %v526 = vpop.permute.xlu0 %525
  %v528 = vlaneseq
  %v529 = vshrl.u32 %v528, 7
  %v530 = vsub.s32 0, %v529
  %v531 = vrot.slane %v435, %v530
  %v532 = vmul.f32 %v526, %v531
  %v533 = vadd.f32 %v523, %v532
  %534 = vset.pattern.permute.xlu0 9
  %535 = vperm.xlu0 %534, %v436
  %v536 = vpop.permute.xlu0 %535
  %v538 = vlaneseq
  %v539 = vshrl.u32 %v538, 7
  %v540 = vsub.s32 1, %v539
  %v541 = vrot.slane %v435, %v540
  %v542 = vmul.f32 %v536, %v541
  %v543 = vadd.f32 %v533, %v542
  %544 = vst [vmem:[%s7] sm:$0xf] %v543
  // Predicated region
  $region30: #{blob_classification.1} parent=0 // pred_check
    _
  $region31: #{blob_classification.1} parent=0 // pred_check_branch
    %546 = sbr.rel (0) target = $region33
  $region32: #{blob_classification.1} parent=0 // pred_region
    _
  $region33: #{blob_classification.1} parent=0 // pred_fallthru
    _
  // Predicated region
  $region34: #{blob_classification.1} parent=0 // pred_check
    _
  $region35: #{blob_classification.1} parent=0 // pred_check_branch
    %548 = sbr.rel (0) target = $region37
  $region36: #{blob_classification.1} parent=0 // pred_region
    _
  $region37: #{blob_classification.1} parent=0 // pred_fallthru
    _

</llo_original>
